<compile_context>
chip_gen: v7x
topology: tpu7x:2x2x1
jax: 0.10.0
libtpu: 0.0.40
codegen_flags: <defaults>
</compile_context>

<pallas_src>
import jax
import jax.numpy as jnp
import numpy as np
from jax.experimental import pallas as pl
from jax.experimental.pallas import tpu as pltpu


def _round_up(x, m):
    return ((x + m - 1) // m) * m


def _vmem_budget_bytes():
    """Generation-aware VMEM limit: ~3/4 of physical, capped at 96 MiB.

    v7x (64 MiB physical) -> ~48 MiB; v5e/v6e (128 MiB) -> 96 MiB.
    """
    try:
        cap = int(pltpu.get_tpu_info().vmem_capacity_bytes)
    except Exception:  # query unavailable -> conservative default
        cap = 128 * 1024 * 1024
    return min(cap * 3 // 4, 96 * 1024 * 1024)


def _choose_lane_tile(T, n_lanes, requested, vmem_budget):
    """Pick a lane tile (multiple of 128) sized from the VMEM budget.

    Per grid step (conservative): x + probs double-buffered plus ~3 f32
    intermediates (s, e, p) ~= 7 * T * tile * 4 B, plus one weight buffer.
    """
    per_lane = 7 * T * 4
    avail = vmem_budget - T * T * 4 - (1 << 20)
    fit = max(128, avail // per_lane)
    n_pad = _round_up(n_lanes, 128)
    tile = min(int(requested), int(fit), n_pad)
    # Keep the grid at >= 2 steps so v7x's two TensorCores both get work.
    if n_pad >= 256:
        tile = min(tile, max(128, (n_pad // 2) // 128 * 128))
    return max(128, tile // 128 * 128)


def _attention_block_kernel(x_ref, w_ref, b_ref, probs_ref, vec_ref):
    # x_ref:     (T, TN)  lane tile of X (one lane per (b, d) pair)
    # w_ref:     (T, T)   Linear weight (out_features, in_features), grid-invariant
    # b_ref:     (T, 1)   Linear bias as a column (broadcast over lanes)
    # probs_ref: (T, TN)  softmax(W @ X + b) over the T axis
    # vec_ref:   (1, TN)  sum_t probs[t, :] * x[t, :]
    x = x_ref[...]
    w = w_ref[...]
    xm = x.astype(w.dtype) if w.dtype != x.dtype else x  # bf16 matmul path (large T)

    # S[t_out, n] = sum_{t_in} W[t_out, t_in] * x[t_in, n] + bias[t_out]
    s = jnp.dot(w, xm, preferred_element_type=jnp.float32)
    s = s + b_ref[...].astype(jnp.float32)

    # Numerically stable softmax over t_out (axis 0); independent per lane.
    m = jnp.max(s, axis=0, keepdims=True)          # (1, TN)
    e = jnp.exp(s - m)                             # (T, TN)
    denom = jnp.sum(e, axis=0, keepdims=True)      # (1, TN)
    # Exact normalization: mem-bound kernel, VALU has slack; rows sum to 1.
    p = e / denom                                  # (T, TN)

    probs_ref[...] = p.astype(probs_ref.dtype)

    # attention_vec for this lane tile: one lane-dense store per grid step.
    vec = jnp.sum(p * x.astype(jnp.float32), axis=0, keepdims=True)  # (1, TN)
    vec_ref[...] = vec.astype(vec_ref.dtype)


def attention_block(inputs, weight, bias, *, lane_tile=4096, probs_dtype=None):
    """inputs: (B, T, D), weight: (T, T), bias: (T,).
    Returns (attention_vec (B, D), attention_probs (B, T, D))."""
    B, T, D = inputs.shape
    out_dtype = inputs.dtype
    probs_dtype = probs_dtype or out_dtype  # pass bf16 to halve probs writeback
    budget = _vmem_budget_bytes()

    # Large-T: bf16 matmul inputs (MXU peak on v6e/v7x, halves W's HBM fetch);
    # accumulation and all softmax math stay f32 (v5e has no bf16 VPU/EUP).
    w = weight
    if T >= 256 and weight.dtype == jnp.float32:
        w = weight.astype(jnp.bfloat16)
    bias_col = bias.reshape(T, 1).astype(jnp.float32)
    wb_bytes = T * T * jnp.dtype(w.dtype).itemsize + T * 4

    # Grid-invariant weight / bias: constant block index, single buffer.
    def inv_spec(shape):
        return pl.BlockSpec(shape, lambda *_: (0,) * len(shape),
                            pipeline_mode=pl.Buffered(1))

    if D >= 128 and D % 128 == 0:
        # ---- Native (B, T, D) path: no host-side transposes at all. ----
        tile = _choose_lane_tile(T, D, lane_tile, budget)
        while D % tile:           # tile must divide D (D is a multiple of 128)
            tile -= 128
        grid = (B, D // tile)
        n_total = B * D
        cost = pl.CostEstimate(
            flops=2 * T * T * n_total + 6 * T * n_total,
            transcendentals=T * n_total,
            bytes_accessed=4 * (2 * T * n_total + n_total) + wb_bytes,
        )
        probs, vec3 = pl.pallas_call(
            _attention_block_kernel,
            out_shape=(
                jax.ShapeDtypeStruct((B, T, D), probs_dtype),
                jax.ShapeDtypeStruct((B, 1, D), out_dtype),
            ),
            grid_spec=pltpu.PrefetchScalarGridSpec(
                num_scalar_prefetch=0,
                grid=grid,
                in_specs=[
                    pl.BlockSpec((pl.Squeezed(), T, tile), lambda b, j: (b, 0, j)),
                    inv_spec((T, T)),
                    inv_spec((T, 1)),
                ],
                out_specs=[
                    pl.BlockSpec((pl.Squeezed(), T, tile), lambda b, j: (b, 0, j)),
                    pl.BlockSpec((pl.Squeezed(), 1, tile), lambda b, j: (b, 0, j)),
                ],
            ),
            compiler_params=pltpu.CompilerParams(
                dimension_semantics=("parallel", "parallel"),
                vmem_limit_bytes=budget,
            ),
            cost_estimate=cost,
        )(inputs, w, bias_col)
        return vec3[:, 0, :], probs

    # ---- Tiny-D fallback: fold batch into lanes -> (T, B*D) lane-dense. ----
    N = B * D
    x = jnp.transpose(inputs, (1, 0, 2)).reshape(T, N)
    tile = _choose_lane_tile(T, N, lane_tile, budget)
    n_pad = _round_up(N, tile)
    if n_pad != N:
        # Zero padding: pad lanes compute softmax(bias) (finite, no NaN) and are
        # sliced off below -- do NOT change the pad value to -inf.
        x = jnp.pad(x, ((0, 0), (0, n_pad - N)))
    grid = (n_pad // tile,)
    cost = pl.CostEstimate(
        flops=2 * T * T * n_pad + 6 * T * n_pad,
        transcendentals=T * n_pad,
        bytes_accessed=4 * (2 * T * n_pad + n_pad) + wb_bytes,
    )
    probs_flat, vec_flat = pl.pallas_call(
        _attention_block_kernel,
        out_shape=(
            jax.ShapeDtypeStruct((T, n_pad), probs_dtype),
            jax.ShapeDtypeStruct((1, n_pad), out_dtype),
        ),
        grid_spec=pltpu.PrefetchScalarGridSpec(
            num_scalar_prefetch=0,
            grid=grid,
            in_specs=[
                pl.BlockSpec((T, tile), lambda j: (0, j)),
                inv_spec((T, T)),
                inv_spec((T, 1)),
            ],
            out_specs=[
                pl.BlockSpec((T, tile), lambda j: (0, j)),
                pl.BlockSpec((1, tile), lambda j: (0, j)),
            ],
        ),
        compiler_params=pltpu.CompilerParams(
            dimension_semantics=("parallel",),
            vmem_limit_bytes=budget,
        ),
        cost_estimate=cost,
    )(x, w, bias_col)
    probs = probs_flat[:, :N].reshape(T, B, D).transpose(1, 0, 2)  # (B, T, D)
    vec = vec_flat[0, :N].reshape(B, D)                            # (B, D)
    return vec, probs


def attention_block_ref(inputs, weight, bias):
    """Pure-JAX reference mirroring the PyTorch forward (high-precision matmul)."""
    inputs_t = jnp.swapaxes(inputs, 2, 1)                              # (B, D, T)
    attn_w = jnp.einsum("bdt,ot->bdo", inputs_t, weight,
                        precision=jax.lax.Precision.HIGHEST) + bias    # Linear
    attn_p = jax.nn.softmax(attn_w, axis=-1)                           # (B, D, T)
    attn_p = jnp.swapaxes(attn_p, 2, 1)                                # (B, T, D)
    attn_vec = jnp.sum(attn_p * inputs, axis=1)                        # (B, D)
    return attn_vec, attn_p


if __name__ == "__main__":
    key = jax.random.PRNGKey(0)

    def run_case(B, T, D, case_key):
        k_x, k_w, k_b = jax.random.split(case_key, 3)
        x = jax.random.normal(k_x, (B, T, D), dtype=jnp.float32)
        # nn.Linear(time_step, time_step): weight (T, T), bias (T,)
        bound = 1.0 / np.sqrt(T)
        weight = jax.random.uniform(k_w, (T, T), minval=-bound, maxval=bound,
                                    dtype=jnp.float32)
        bias = jax.random.uniform(k_b, (T,), minval=-bound, maxval=bound,
                                  dtype=jnp.float32)

        vec, probs = attention_block(x, weight, bias)
        jax.block_until_ready((vec, probs))

        vec_ref, probs_ref = attention_block_ref(x, weight, bias)
        np.testing.assert_allclose(np.asarray(vec), np.asarray(vec_ref),
                                   rtol=2e-3, atol=2e-3)
        np.testing.assert_allclose(np.asarray(probs), np.asarray(probs_ref),
                                   rtol=2e-3, atol=2e-3)

    # Small shape consistent with the module (batch=2, time_step=8, dim=16):
    # exercises the folded-lane path.
    run_case(2, 8, 16, jax.random.fold_in(key, 0))
    # Lane-dense dim: exercises the native (B, T, D) path with a (batch, lane) grid.
    run_case(2, 16, 256, jax.random.fold_in(key, 1))

    print("KERNEL_OK")
</pallas_src>

<mosaic_0001>
module attributes {stable_mosaic.version = 11 : i64} {
  func.func @_attention_block_kernel(%arg0: i32, %arg1: memref<8x128xf32, #tpu.memory_space<vmem>>, %arg2: memref<8x8xf32, #tpu.memory_space<vmem>>, %arg3: memref<8x1xf32, #tpu.memory_space<vmem>>, %arg4: memref<8x128xf32, #tpu.memory_space<vmem>>, %arg5: memref<1x128xf32, #tpu.memory_space<vmem>>) attributes {dimension_semantics = [#tpu.dimension_semantics<parallel>], iteration_bounds = array<i64: 1>, scalar_prefetch = 0 : i64, scratch_operands = 0 : i64, tpu.core_type = #tpu.core_type<tc>, window_params = [{transform_indices = @transform_0, window_bounds = array<i64: 8, 128>}, {pipeline_mode = #tpu.pipeline_mode<synchronous>, transform_indices = @transform_1, window_bounds = array<i64: 8, 8>}, {pipeline_mode = #tpu.pipeline_mode<synchronous>, transform_indices = @transform_2, window_bounds = array<i64: 8, 1>}, {transform_indices = @transform_3, window_bounds = array<i64: 8, 128>}, {transform_indices = @transform_4, window_bounds = array<i64: 1, 128>}]} {
    %c0 = arith.constant 0 : index
    %c0_0 = arith.constant 0 : index
    %0 = vector.load %arg1[%c0, %c0_0] : memref<8x128xf32, #tpu.memory_space<vmem>>, vector<8x128xf32>
    %c0_1 = arith.constant 0 : index
    %c0_2 = arith.constant 0 : index
    %1 = vector.load %arg2[%c0_1, %c0_2] : memref<8x8xf32, #tpu.memory_space<vmem>>, vector<8x8xf32>
    %cst = arith.constant dense<0.000000e+00> : vector<8x128xf32>
    %2 = tpu.matmul %1, %0, %cst {dimension_numbers = #tpu.dot_dimension_numbers<[1], [0], [0], [1], [0, 0, 1, 1], [], []>} : vector<8x8xf32>, vector<8x128xf32>, vector<8x128xf32> -> vector<8x128xf32>
    %c0_3 = arith.constant 0 : index
    %c0_4 = arith.constant 0 : index
    %3 = vector.load %arg3[%c0_3, %c0_4] : memref<8x1xf32, #tpu.memory_space<vmem>>, vector<8x1xf32>
    %4 = vector.broadcast %3 : vector<8x1xf32> to vector<8x128xf32>
    %5 = arith.addf %2, %4 : vector<8x128xf32>
    %cst_5 = arith.constant dense<0xFF800000> : vector<128xf32>
    %6 = vector.multi_reduction <maximumf>, %5, %cst_5 [0] : vector<8x128xf32> to vector<128xf32>
    %7 = vector.shape_cast %6 : vector<128xf32> to vector<1x128xf32>
    %8 = vector.broadcast %7 : vector<1x128xf32> to vector<8x128xf32>
    %9 = arith.subf %5, %8 : vector<8x128xf32>
    %10 = math.exp %9 : vector<8x128xf32>
    %cst_6 = arith.constant dense<0.000000e+00> : vector<128xf32>
    %11 = vector.multi_reduction <add>, %10, %cst_6 [0] : vector<8x128xf32> to vector<128xf32>
    %12 = vector.shape_cast %11 : vector<128xf32> to vector<1x128xf32>
    %13 = vector.broadcast %12 : vector<1x128xf32> to vector<8x128xf32>
    %14 = arith.divf %10, %13 : vector<8x128xf32>
    %c0_7 = arith.constant 0 : index
    %c0_8 = arith.constant 0 : index
    %15 = vector.load %arg4[%c0_7, %c0_8] : memref<8x128xf32, #tpu.memory_space<vmem>>, vector<8x128xf32>
    tpu.vector_store %arg4[%c0_7, %c0_8], %14 {strides = array<i32>} : memref<8x128xf32, #tpu.memory_space<vmem>>, vector<8x128xf32>,
    %16 = arith.mulf %14, %0 : vector<8x128xf32>
    %cst_9 = arith.constant dense<0.000000e+00> : vector<128xf32>
    %17 = vector.multi_reduction <add>, %16, %cst_9 [0] : vector<8x128xf32> to vector<128xf32>
    %18 = vector.shape_cast %17 : vector<128xf32> to vector<1x128xf32>
    %c0_10 = arith.constant 0 : index
    %c0_11 = arith.constant 0 : index
    %19 = vector.load %arg5[%c0_10, %c0_11] : memref<1x128xf32, #tpu.memory_space<vmem>>, vector<1x128xf32>
    tpu.vector_store %arg5[%c0_10, %c0_11], %18 {strides = array<i32>} : memref<1x128xf32, #tpu.memory_space<vmem>>, vector<1x128xf32>,
    return
  }
  func.func @transform_0(%arg0: i32) -> (i32, i32) {
    %c0_i32 = arith.constant 0 : i32
    %c0_i32_0 = arith.constant 0 : i32
    return %c0_i32, %arg0 : i32, i32
  }
  func.func @transform_1(%arg0: i32) -> (i32, i32) {
    %c0_i32 = arith.constant 0 : i32
    %c0_i32_0 = arith.constant 0 : i32
    %c0_i32_1 = arith.constant 0 : i32
    return %c0_i32, %c0_i32_0 : i32, i32
  }
  func.func @transform_2(%arg0: i32) -> (i32, i32) {
    %c0_i32 = arith.constant 0 : i32
    %c0_i32_0 = arith.constant 0 : i32
    %c0_i32_1 = arith.constant 0 : i32
    return %c0_i32, %c0_i32_0 : i32, i32
  }
  func.func @transform_3(%arg0: i32) -> (i32, i32) {
    %c0_i32 = arith.constant 0 : i32
    %c0_i32_0 = arith.constant 0 : i32
    return %c0_i32, %arg0 : i32, i32
  }
  func.func @transform_4(%arg0: i32) -> (i32, i32) {
    %c0_i32 = arith.constant 0 : i32
    %c0_i32_0 = arith.constant 0 : i32
    return %c0_i32, %arg0 : i32, i32
  }
}

</mosaic_0001>

<llo_original>
// kernel: tpu_custom_call.1
$region0: #{tpu_custom_call.1}
  #allocation0 [shape = 'u32[]', space=smem, size = 0x4, offset = 0x4, fixed_abs, tag = 'smem constant byte address 0x4 - core index']
  #allocation1 [shape = 'u32[144,128]{1,0:T(1,128)}', space=vmem, size = 0x12000, scoped, tag = 'internal scratch']
  %s0 = inlined_call_operand.hbm [shape: f32[8,128], index: 0, kind: input, shape index: {}]
  %s1 = inlined_call_operand.hbm [shape: f32[8,8], index: 1, kind: input, shape index: {}]
  %s2 = inlined_call_operand.hbm [shape: f32[8,1], index: 2, kind: input, shape index: {}]
  %s3 = inlined_call_operand.hbm [shape: f32[8,128], index: 3, kind: output, shape index: {0}]
  %s4 = inlined_call_operand.hbm [shape: f32[1,128], index: 4, kind: output, shape index: {1}]
  %5 = xla_tuple %s3, %s4
  %s6 = sld [smem:[#allocation0]]
  $region42: #{tpu_custom_call.1} parent=0
    _
  %s8 = ssub.s32 1, %s6
  %s9 = scalar_select 0, %s8, %s6
  $region1: #{tpu_custom_call.1} parent=0
    #allocation2 [shape = 'u8[4096]{0}', space=vmem, size = 0x1000, scoped, tag = 'input window, operand 0, single buffered']
    #allocation3 [shape = 's32[1]{0}', space=sflag, size = 0x4, scoped, tag = 'scoped memory for tpu_custom_call.1']
    #allocation4 [shape = 's32[1]{0}', space=sflag, size = 0x4, scoped, tag = 'scoped memory for tpu_custom_call.1']
    #allocation5 [shape = 'u8[4096]{0}', space=vmem, size = 0x1000, scoped, tag = 'input window, operand 1, single buffered']
    #allocation6 [shape = 's32[1]{0}', space=sflag, size = 0x4, scoped, tag = 'scoped memory for tpu_custom_call.1']
    #allocation7 [shape = 'u8[4096]{0}', space=vmem, size = 0x1000, scoped, tag = 'input window, operand 2, single buffered']
    #allocation8 [shape = 'u8[4096]{0}', space=vmem, size = 0x1000, scoped, tag = 'output window, operand 0, single buffered']
    #allocation9 [shape = 'u8[512]{0}', space=vmem, size = 0x400, scoped, tag = 'output window, operand 1, single buffered']
    #allocation10 [shape = 's32[1]{0}', space=sflag, size = 0x4, scoped, tag = 'scoped memory for tpu_custom_call.1']
    %10 = vsyncpa [#allocation3], 0
    %11 = vsyncpa [#allocation6], 0
    %12 = vsyncpa [#allocation4], 0
    %13 = vsyncpa [#allocation10], 0
    // Predicated region
    $region2: #{tpu_custom_call.1} parent=1 // pred_check
      _
    $region3: #{tpu_custom_call.1} parent=1 // pred_check_branch
      %15 = sbr.rel (0) target = $region5
    $region4: #{tpu_custom_call.1} parent=1 // pred_region
      %s17 = ssub.s32 128, 128
      %18 = vsyncadd [#allocation3], %s17
      %s20 = sshll.u32 [#allocation2], 4
      %s21 = int_to_ptr.vmem [resolvable:$true] %s20
      %23 = dma.hbm_to_vmem [thread:$0]  %s0, 128, %s21, [#allocation3]
    $region5: #{tpu_custom_call.1} parent=1 // pred_fallthru
      _
    // Predicated region
    $region6: #{tpu_custom_call.1} parent=1 // pred_check
      _
    $region7: #{tpu_custom_call.1} parent=1 // pred_check_branch
      %25 = sbr.rel (0) target = $region9
    $region8: #{tpu_custom_call.1} parent=1 // pred_region
      %s27 = ssub.s32 128, 128
      %28 = vsyncadd [#allocation6], %s27
      %s30 = sshll.u32 [#allocation5], 4
      %s31 = int_to_ptr.vmem [resolvable:$true] %s30
      %33 = dma.hbm_to_vmem [thread:$0]  %s1, 128, %s31, [#allocation6]
    $region9: #{tpu_custom_call.1} parent=1 // pred_fallthru
      _
    // Predicated region
    $region10: #{tpu_custom_call.1} parent=1 // pred_check
      _
    $region11: #{tpu_custom_call.1} parent=1 // pred_check_branch
      %35 = sbr.rel (0) target = $region13
    $region12: #{tpu_custom_call.1} parent=1 // pred_region
      %s37 = ssub.s32 128, 128
      %38 = vsyncadd [#allocation6], %s37
      %s40 = sshll.u32 [#allocation7], 4
      %s41 = int_to_ptr.vmem [resolvable:$true] %s40
      %43 = dma.hbm_to_vmem [thread:$0]  %s2, 128, %s41, [#allocation6]
    $region13: #{tpu_custom_call.1} parent=1 // pred_fallthru
      _
    // Predicated region
    $region14: #{tpu_custom_call.1} parent=1 // pred_check
      _
    $region15: #{tpu_custom_call.1} parent=1 // pred_check_branch
      %45 = sbr.rel (0) target = $region17
    $region16: #{tpu_custom_call.1} parent=1 // pred_region
      %46 = dma.done [#allocation3], 128
    $region17: #{tpu_custom_call.1} parent=1 // pred_fallthru
      _
    // Predicated region
    $region18: #{tpu_custom_call.1} parent=1 // pred_check
      _
    $region19: #{tpu_custom_call.1} parent=1 // pred_check_branch
      %48 = sbr.rel (0) target = $region21
    $region20: #{tpu_custom_call.1} parent=1 // pred_region
      %49 = dma.done [#allocation6], 128
    $region21: #{tpu_custom_call.1} parent=1 // pred_fallthru
      _
    // Predicated region
    $region22: #{tpu_custom_call.1} parent=1 // pred_check
      _
    $region23: #{tpu_custom_call.1} parent=1 // pred_check_branch
      %51 = sbr.rel (0) target = $region25
    $region24: #{tpu_custom_call.1} parent=1 // pred_region
      %52 = dma.done [#allocation6], 128
    $region25: #{tpu_custom_call.1} parent=1 // pred_fallthru
      _
    %v53 = vld [vmem:[#allocation2] sm:$0xff]
    %v54 = vld [vmem:[#allocation5] sm:$0xff]
    %v55 = vld [vmem:[#allocation7] sm:$0xff]
    %57 = vset.pattern.permute.xlu0 0
    %58 = vperm.xlu0 %57, %v55
    %v59 = vpop.permute.xlu0 %58
    %vm61 = vcmask 64512
    %v63 = vsel %vm61, %v54, 0
    %65 = vmatprep.subr.mxu0 0.0
    %66 = vmatpush1.msra.mxu0 %v53
    %67 = vmatprep.subr.mxu0 0.0
    %68 = vmatpush1.msra.mxu0 0.0
    %69 = vmatprep.subr.mxu0 0.0
    %70 = vmatpush1.msra.mxu0 0.0
    %71 = vmatprep.subr.mxu0 0.0
    %72 = vmatpush1.msra.mxu0 0.0
    %73 = vmatprep.subr.mxu0 0.0
    %74 = vmatpush1.msra.mxu0 0.0
    %75 = vmatprep.subr.mxu0 0.0
    %76 = vmatpush1.msra.mxu0 0.0
    %77 = vmatprep.subr.mxu0 0.0
    %78 = vmatpush1.msra.mxu0 0.0
    %79 = vmatprep.subr.mxu0 0.0
    %80 = vmatpush1.msra.mxu0 0.0
    %81 = vmatprep.subr.mxu0 0.0
    %82 = vmatpush1.msra.mxu0 0.0
    %83 = vmatprep.subr.mxu0 0.0
    %84 = vmatpush1.msra.mxu0 0.0
    %85 = vmatprep.subr.mxu0 0.0
    %86 = vmatpush1.msra.mxu0 0.0
    %87 = vmatprep.subr.mxu0 0.0
    %88 = vmatpush1.msra.mxu0 0.0
    %89 = vmatprep.subr.mxu0 0.0
    %90 = vmatpush1.msra.mxu0 0.0
    %91 = vmatprep.subr.mxu0 0.0
    %92 = vmatpush1.msra.mxu0 0.0
    %93 = vmatprep.subr.mxu0 0.0
    %94 = vmatpush1.msra.mxu0 0.0
    %95 = vmatprep.subr.mxu0 0.0
    %96 = vmatpush1.msra.mxu0 0.0
    %97 = vmatprep.subr.mxu0 0.0
    %98 = vmatpush1.msra.mxu0 0.0
    %99 = vmatprep.subr.mxu0 0.0
    %100 = vmatpush1.msra.mxu0 0.0
    %101 = vmatprep.subr.mxu0 0.0
    %102 = vmatpush1.msra.mxu0 0.0
    %103 = vmatprep.subr.mxu0 0.0
    %104 = vmatpush1.msra.mxu0 0.0
    %105 = vmatprep.subr.mxu0 0.0
    %106 = vmatpush1.msra.mxu0 0.0
    %107 = vmatprep.subr.mxu0 0.0
    %108 = vmatpush1.msra.mxu0 0.0
    %109 = vmatprep.subr.mxu0 0.0
    %110 = vmatpush1.msra.mxu0 0.0
    %111 = vmatprep.subr.mxu0 0.0
    %112 = vmatpush1.msra.mxu0 0.0
    %113 = vmatprep.subr.mxu0 0.0
    %114 = vmatpush1.msra.mxu0 0.0
    %115 = vmatprep.subr.mxu0 0.0
    %116 = vmatpush1.msra.mxu0 0.0
    %117 = vmatprep.subr.mxu0 0.0
    %118 = vmatpush1.msra.mxu0 0.0
    %119 = vmatprep.subr.mxu0 0.0
    %120 = vmatpush1.msra.mxu0 0.0
    %121 = vmatprep.subr.mxu0 0.0
    %122 = vmatpush1.msra.mxu0 0.0
    %123 = vmatprep.subr.mxu0 0.0
    %124 = vmatpush1.msra.mxu0 0.0
    %125 = vmatprep.subr.mxu0 0.0
    %126 = vmatpush1.msra.mxu0 0.0
    %127 = vmatprep.subr.mxu0 0.0
    %128 = vmatpush1.msra.mxu0 0.0
    %129 = vmatprep.mubr.f32.mxu0 0.0
    %130 = vmatmul.mubr.f32.gmra.mrb[0].mxu0 %v63
    %v131 = vpop.f32.mrb[0].mxu0
    %v132 = vadd.f32 %v59, %v131
    %v133 = vpop.f32.mrb[0].mxu0
    %134 = vdwg.mxu0
    %v135 = vrot.slane %v132, 4
    %v136 = vmax.f32 %v132, %v135
    %v137 = vrot.slane %v136, 2
    %v138 = vmax.f32 %v136, %v137
    %v139 = vrot.slane %v138, 1
    %v140 = vmax.f32 %v138, %v139
    %v141 = vsub.f32 %v132, %v140
    %v142 = vmul.f32 %v141, 1.442695
    %v143 = vpow.pop %v142
    %v144 = vrot.slane %v143, 4
    %v145 = vadd.f32 %v143, %v144
    %v146 = vrot.slane %v145, 2
    %v147 = vadd.f32 %v145, %v146
    %v148 = vrot.slane %v147, 1
    %v149 = vadd.f32 %v147, %v148
    %v150 = vrcp.pop %v149
    %v151 = vmul.f32 %v143, %v150
    %152 = vst [vmem:[#allocation8] sm:$0xff] %v151
    %v153 = vmul.f32 %v151, %v53
    %v154 = vrot.slane %v153, 4
    %v155 = vadd.f32 %v153, %v154
    %v156 = vrot.slane %v155, 2
    %v157 = vadd.f32 %v155, %v156
    %v158 = vrot.slane %v157, 1
    %v159 = vadd.f32 %v157, %v158
    %160 = vst [vmem:[#allocation9] sm:$0x1] %v159
    // Predicated region
    $region26: #{tpu_custom_call.1} parent=1 // pred_check
      _
    $region27: #{tpu_custom_call.1} parent=1 // pred_check_branch
      %162 = sbr.rel (0) target = $region29
    $region28: #{tpu_custom_call.1} parent=1 // pred_region
      %s164 = ssub.s32 128, 128
      %165 = vsyncadd [#allocation4], %s164
      %s167 = sshll.u32 [#allocation8], 4
      %s168 = int_to_ptr.vmem [resolvable:$true] %s167
      %170 = dma.vmem_to_hbm [thread:$0]  %s168, 128, %s3, [#allocation4]
    $region29: #{tpu_custom_call.1} parent=1 // pred_fallthru
      _
    // Predicated region
    $region30: #{tpu_custom_call.1} parent=1 // pred_check
      _
    $region31: #{tpu_custom_call.1} parent=1 // pred_check_branch
      %172 = sbr.rel (0) target = $region33
    $region32: #{tpu_custom_call.1} parent=1 // pred_region
      %s174 = ssub.s32 16, 16
      %175 = vsyncadd [#allocation10], %s174
      %s177 = sshll.u32 [#allocation9], 4
      %s178 = int_to_ptr.vmem [resolvable:$true] %s177
      %180 = dma.vmem_to_hbm [thread:$0]  %s178, 16, %s4, [#allocation10]
    $region33: #{tpu_custom_call.1} parent=1 // pred_fallthru
      _
    // Predicated region
    $region34: #{tpu_custom_call.1} parent=1 // pred_check
      _
    $region35: #{tpu_custom_call.1} parent=1 // pred_check_branch
      %182 = sbr.rel (0) target = $region37
    $region36: #{tpu_custom_call.1} parent=1 // pred_region
      %183 = dma.done [#allocation4], 128
    $region37: #{tpu_custom_call.1} parent=1 // pred_fallthru
      _
    // Predicated region
    $region38: #{tpu_custom_call.1} parent=1 // pred_check
      _
    $region39: #{tpu_custom_call.1} parent=1 // pred_check_branch
      %185 = sbr.rel (0) target = $region41
    $region40: #{tpu_custom_call.1} parent=1 // pred_region
      %186 = dma.done [#allocation10], 16
    $region41: #{tpu_custom_call.1} parent=1 // pred_fallthru
      _
    %187 = vsyncpa [#allocation3], 1
    %188 = vsyncpa [#allocation6], 1
    %189 = vsyncpa [#allocation4], 1
    %190 = vsyncpa [#allocation10], 1

</llo_original>
